<compile_context>
chip_gen: v7x
topology: tpu7x:2x2x1
jax: 0.10.0
libtpu: 0.0.40
codegen_flags: <defaults>
</compile_context>

<pallas_src>
import jax
import jax.numpy as jnp
import numpy as np
from jax.experimental import pallas as pl
from jax.experimental.pallas import tpu as pltpu


def _round_up(x, m):
    return ((x + m - 1) // m) * m


def _cdiv(a, b):
    return (a + b - 1) // b


def _l2norm(x):
    # l2norm along last dim: x / sqrt(sum(x^2))   (no eps, matching the reference l2norm)
    return x * jax.lax.rsqrt(jnp.sum(x * x, axis=-1, keepdims=True))


def artemis_score_kernel(r_ref, m_ref, t_ref, wcat_ref, bcat_ref, w2_ref, b2_ref, out_ref):
    dp = m_ref.shape[-1]

    m = m_ref[...]                              # (TB, Dp) bf16, MXU-only operand
    r = r_ref[...].astype(jnp.float32)          # bf16 on the wire, f32 in-register
    t = t_ref[...].astype(jnp.float32)

    # Fused Linear: [Attention_EM layer-1 | Transform_m] share the same LHS m -> one MXU pass.
    z = jnp.dot(m, wcat_ref[...], preferred_element_type=jnp.float32) + bcat_ref[...]
    h = jnp.maximum(z[:, :dp], 0.0)             # attention hidden (ReLU), f32
    v = z[:, dp:]                               # Transform_m output (pre-l2norm)

    # Attention_EM second Linear. The Softmax(dim=1) normalization (divide by sum(exp)) is a
    # positive per-row scalar that cancels under the downstream l2norm, so it is dropped;
    # the row-max subtraction is kept for overflow safety. Padded lanes carry bias -1e30,
    # so exp() underflows to exactly 0 there and they vanish from all reductions.
    logits = jnp.dot(h.astype(jnp.bfloat16), w2_ref[...],
                     preferred_element_type=jnp.float32) + b2_ref[...]
    logits = logits - jnp.max(logits, axis=-1, keepdims=True)
    e = jnp.exp(logits)                         # un-normalized attention weights
    u = e * t                                   # (A_EM(m) * t) up to a per-row scale

    # Cosine-style fused reductions: EM = cos(v, u), IS = cos(r, t). No (TB, Dp) l2norm temps.
    vu = jnp.sum(v * u, axis=-1)
    vv = jnp.sum(v * v, axis=-1)
    uu = jnp.sum(u * u, axis=-1)
    rt = jnp.sum(r * t, axis=-1)
    rr = jnp.sum(r * r, axis=-1)
    tt = jnp.sum(t * t, axis=-1)

    em = vu * jax.lax.rsqrt(vv) * jax.lax.rsqrt(uu)
    is_ = rt * jax.lax.rsqrt(rr) * jax.lax.rsqrt(tt)
    score = em + is_                                    # (TB,)
    out_ref[...] = score.reshape(1, score.shape[0])     # lane-dense (1, TB) row store


def _vmem_budget_bytes():
    cap = 64 << 20                                      # conservative default (v7x physical)
    try:
        cap = int(getattr(pltpu.get_tpu_info(), "vmem_capacity_bytes", cap))
    except Exception:
        pass
    # ~75% of physical VMEM: ~48 MiB on v7x (64 MiB), ~96 MiB on v5e/v6e (128 MiB).
    return max(32 << 20, (cap * 3) // 4)


def _choose_tb(batch, dp, budget):
    # Constant-index resident weights (fused Dp x 2Dp + Dp x Dp, bf16) are still
    # double-buffered by the default pipeline -> count them twice.
    resident = 2 * ((2 * dp * dp + dp * dp) * 2 + 4 * dp * 4)
    # Per-row VMEM: double-buffered bf16 r/m/t tiles + f32 z/h/logits/e/u epilogue temps.
    per_row = 3 * 2 * dp * 2 + 10 * dp * 4
    tb_max = (budget - resident) // per_row
    # 512-1024 is the pipelining sweet spot; never push to 2048 (vreg/VMEM pressure).
    tb_max = max(128, min(1024, (tb_max // 128) * 128))
    # Balance tiles to minimize batch padding, and prefer >=2 tiles so both v7x TensorCores
    # (and the pipeline prologue/epilogue) have work whenever the batch allows it.
    b128 = _round_up(batch, 128)
    n_tiles = _cdiv(b128, tb_max)
    if b128 >= 256:
        n_tiles = max(n_tiles, 2)
    tb = _round_up(_cdiv(batch, n_tiles), 128)
    # TODO(synk): if the resident weights alone exceed the budget (huge embed_dim), the
    # weights themselves would need K-tiling; not needed for realistic ARTEMIS embed_dims.
    return int(min(tb, tb_max))


def artemis_score(r, m, t, params, tb=None):
    """r, m, t: (B, D) float32 embeddings. Returns (B,) ARTEMIS scores (EM + IS)."""
    B, D = r.shape
    w1, b1, w2, b2, wtr, btr = params

    dp = _round_up(max(D, 128), 128)
    budget = _vmem_budget_bytes()
    if tb is None:
        tb = _choose_tb(B, dp, budget)
    bp = _round_up(B, tb)

    def pad2(x, rows, cols, value=0.0):
        return jnp.pad(x, ((0, rows - x.shape[0]), (0, cols - x.shape[1])),
                       constant_values=value)

    # Padded batch rows produce NaN scores (rsqrt(0)); they are row-local and sliced off.
    # All embeddings ship as bf16 (matmul/reduce operands) -> 40% less HBM traffic per row.
    r_p = pad2(r, bp, dp).astype(jnp.bfloat16)
    t_p = pad2(t, bp, dp).astype(jnp.bfloat16)
    m_p = pad2(m, bp, dp).astype(jnp.bfloat16)

    # Fuse the two shared-LHS Linears (Attention_EM layer-1 | Transform_m) into one (Dp, 2Dp).
    w_cat = jnp.concatenate([pad2(w1, dp, dp), pad2(wtr, dp, dp)], axis=1).astype(jnp.bfloat16)
    b_cat = jnp.concatenate([pad2(b1, 1, dp), pad2(btr, 1, dp)], axis=1)
    w2_p = pad2(w2, dp, dp).astype(jnp.bfloat16)
    b2_p = pad2(b2, 1, dp, value=-1e30)                 # kill padded lanes after exp

    grid = (bp // tb,)
    out = pl.pallas_call(
        artemis_score_kernel,
        out_shape=jax.ShapeDtypeStruct((1, bp), jnp.float32),
        grid_spec=pltpu.PrefetchScalarGridSpec(
            num_scalar_prefetch=0,
            grid=grid,
            in_specs=[
                pl.BlockSpec((tb, dp), lambda i: (i, 0)),       # r tile (bf16)
                pl.BlockSpec((tb, dp), lambda i: (i, 0)),       # m tile (bf16)
                pl.BlockSpec((tb, dp), lambda i: (i, 0)),       # t tile (bf16)
                pl.BlockSpec((dp, 2 * dp), lambda i: (0, 0)),   # w1|wtr, VMEM-resident
                pl.BlockSpec((1, 2 * dp), lambda i: (0, 0)),    # b1|btr
                pl.BlockSpec((dp, dp), lambda i: (0, 0)),       # w2, VMEM-resident
                pl.BlockSpec((1, dp), lambda i: (0, 0)),        # b2 (padded with -1e30)
            ],
            out_specs=pl.BlockSpec((1, tb), lambda i: (0, i)),  # lane-dense score row
        ),
        compiler_params=pltpu.CompilerParams(
            dimension_semantics=("parallel",),   # independent batch tiles -> megacore/2 TCs
            vmem_limit_bytes=int(budget),
        ),
    )(r_p, m_p, t_p, w_cat, b_cat, w2_p, b2_p)
    return out[0, :B]


def init_params(key, embed_dim):
    """Deterministic parameter init. Weights stored as (in_dim, out_dim)."""
    ks = jax.random.split(key, 6)
    s = 1.0 / np.sqrt(embed_dim)
    w1 = jax.random.uniform(ks[0], (embed_dim, embed_dim), jnp.float32, -s, s)
    b1 = jax.random.uniform(ks[1], (1, embed_dim), jnp.float32, -s, s)
    w2 = jax.random.uniform(ks[2], (embed_dim, embed_dim), jnp.float32, -s, s)
    b2 = jax.random.uniform(ks[3], (1, embed_dim), jnp.float32, -s, s)
    wtr = jax.random.uniform(ks[4], (embed_dim, embed_dim), jnp.float32, -s, s)
    btr = jax.random.uniform(ks[5], (1, embed_dim), jnp.float32, -s, s)
    return (w1, b1, w2, b2, wtr, btr)


def artemis_score_ref(r, m, t, params):
    """Pure-JAX f32 reference mirroring the PyTorch semantics."""
    w1, b1, w2, b2, wtr, btr = params
    h = jnp.maximum(m @ w1 + b1, 0.0)
    a = jax.nn.softmax(h @ w2 + b2, axis=1)             # Softmax(dim=1) on (B, D)
    tr_m = _l2norm(m @ wtr + btr)
    em = jnp.sum(tr_m * _l2norm(a * t), axis=-1)
    is_ = jnp.sum(_l2norm(r) * _l2norm(t), axis=-1)
    return em + is_


if __name__ == "__main__":
    key = jax.random.PRNGKey(0)

    # (batch, embed_dim, forced tile) — second case exercises multi-tile grid + padding.
    for (B, D, tb) in [(8, 32, None), (300, 96, 128)]:
        k_r, k_m, k_t, k_p, key = jax.random.split(key, 5)
        r = jax.random.normal(k_r, (B, D), jnp.float32)
        m = jax.random.normal(k_m, (B, D), jnp.float32)
        t = jax.random.normal(k_t, (B, D), jnp.float32)
        params = init_params(k_p, D)

        score = jax.block_until_ready(artemis_score(r, m, t, params, tb=tb))
        ref = artemis_score_ref(r, m, t, params)
        # bf16 embeddings / MXU operands vs f32 reference -> relaxed tolerance.
        np.testing.assert_allclose(np.asarray(score), np.asarray(ref), rtol=3e-2, atol=3e-2)

    print("KERNEL_OK")
</pallas_src>

<mosaic_0001>
module attributes {stable_mosaic.version = 11 : i64} {
  func.func @artemis_score_kernel(%arg0: i32, %arg1: memref<128x128xbf16, #tpu.memory_space<vmem>>, %arg2: memref<128x128xbf16, #tpu.memory_space<vmem>>, %arg3: memref<128x128xbf16, #tpu.memory_space<vmem>>, %arg4: memref<128x256xbf16, #tpu.memory_space<vmem>>, %arg5: memref<1x256xf32, #tpu.memory_space<vmem>>, %arg6: memref<128x128xbf16, #tpu.memory_space<vmem>>, %arg7: memref<1x128xf32, #tpu.memory_space<vmem>>, %arg8: memref<1x128xf32, #tpu.memory_space<vmem>>) attributes {dimension_semantics = [#tpu.dimension_semantics<parallel>], iteration_bounds = array<i64: 1>, scalar_prefetch = 0 : i64, scratch_operands = 0 : i64, tpu.core_type = #tpu.core_type<tc>, window_params = [{transform_indices = @transform_0, window_bounds = array<i64: 128, 128>}, {transform_indices = @transform_1, window_bounds = array<i64: 128, 128>}, {transform_indices = @transform_2, window_bounds = array<i64: 128, 128>}, {pipeline_mode = #tpu.pipeline_mode<synchronous>, transform_indices = @transform_3, window_bounds = array<i64: 128, 256>}, {pipeline_mode = #tpu.pipeline_mode<synchronous>, transform_indices = @transform_4, window_bounds = array<i64: 1, 256>}, {pipeline_mode = #tpu.pipeline_mode<synchronous>, transform_indices = @transform_5, window_bounds = array<i64: 128, 128>}, {pipeline_mode = #tpu.pipeline_mode<synchronous>, transform_indices = @transform_6, window_bounds = array<i64: 1, 128>}, {transform_indices = @transform_7, window_bounds = array<i64: 1, 128>}]} {
    %c0 = arith.constant 0 : index
    %c0_0 = arith.constant 0 : index
    %0 = vector.load %arg2[%c0, %c0_0] : memref<128x128xbf16, #tpu.memory_space<vmem>>, vector<128x128xbf16>
    %c0_1 = arith.constant 0 : index
    %c0_2 = arith.constant 0 : index
    %1 = vector.load %arg1[%c0_1, %c0_2] : memref<128x128xbf16, #tpu.memory_space<vmem>>, vector<128x128xbf16>
    %2 = arith.extf %1 : vector<128x128xbf16> to vector<128x128xf32>
    %c0_3 = arith.constant 0 : index
    %c0_4 = arith.constant 0 : index
    %3 = vector.load %arg3[%c0_3, %c0_4] : memref<128x128xbf16, #tpu.memory_space<vmem>>, vector<128x128xbf16>
    %4 = arith.extf %3 : vector<128x128xbf16> to vector<128x128xf32>
    %c0_5 = arith.constant 0 : index
    %c0_6 = arith.constant 0 : index
    %5 = vector.load %arg4[%c0_5, %c0_6] : memref<128x256xbf16, #tpu.memory_space<vmem>>, vector<128x256xbf16>
    %cst = arith.constant dense<0.000000e+00> : vector<128x256xf32>
    %6 = tpu.matmul %0, %5, %cst {dimension_numbers = #tpu.dot_dimension_numbers<[1], [0], [0], [1], [0, 0, 1, 1], [], []>} : vector<128x128xbf16>, vector<128x256xbf16>, vector<128x256xf32> -> vector<128x256xf32>
    %c0_7 = arith.constant 0 : index
    %c0_8 = arith.constant 0 : index
    %7 = vector.load %arg5[%c0_7, %c0_8] : memref<1x256xf32, #tpu.memory_space<vmem>>, vector<1x256xf32>
    %8 = vector.broadcast %7 : vector<1x256xf32> to vector<128x256xf32>
    %9 = arith.addf %6, %8 : vector<128x256xf32>
    %10 = vector.extract_strided_slice %9 {offsets = [0, 0], sizes = [128, 128], strides = [1, 1]} : vector<128x256xf32> to vector<128x128xf32>
    %cst_9 = arith.constant 0.000000e+00 : f32
    %11 = vector.broadcast %cst_9 : f32 to vector<128x128xf32>
    %12 = arith.maximumf %10, %11 : vector<128x128xf32>
    %13 = vector.extract_strided_slice %9 {offsets = [0, 128], sizes = [128, 128], strides = [1, 1]} : vector<128x256xf32> to vector<128x128xf32>
    %14 = arith.truncf %12 : vector<128x128xf32> to vector<128x128xbf16>
    %c0_10 = arith.constant 0 : index
    %c0_11 = arith.constant 0 : index
    %15 = vector.load %arg6[%c0_10, %c0_11] : memref<128x128xbf16, #tpu.memory_space<vmem>>, vector<128x128xbf16>
    %cst_12 = arith.constant dense<0.000000e+00> : vector<128x128xf32>
    %16 = tpu.matmul %14, %15, %cst_12 {dimension_numbers = #tpu.dot_dimension_numbers<[1], [0], [0], [1], [0, 0, 1, 1], [], []>} : vector<128x128xbf16>, vector<128x128xbf16>, vector<128x128xf32> -> vector<128x128xf32>
    %c0_13 = arith.constant 0 : index
    %c0_14 = arith.constant 0 : index
    %17 = vector.load %arg7[%c0_13, %c0_14] : memref<1x128xf32, #tpu.memory_space<vmem>>, vector<1x128xf32>
    %18 = vector.broadcast %17 : vector<1x128xf32> to vector<128x128xf32>
    %19 = arith.addf %16, %18 : vector<128x128xf32>
    %cst_15 = arith.constant dense<0xFF800000> : vector<128xf32>
    %20 = vector.multi_reduction <maximumf>, %19, %cst_15 [1] : vector<128x128xf32> to vector<128xf32>
    %21 = vector.shape_cast %20 : vector<128xf32> to vector<128x1xf32>
    %22 = vector.broadcast %21 : vector<128x1xf32> to vector<128x128xf32>
    %23 = arith.subf %19, %22 : vector<128x128xf32>
    %24 = math.exp %23 : vector<128x128xf32>
    %25 = arith.mulf %24, %4 : vector<128x128xf32>
    %26 = arith.mulf %13, %25 : vector<128x128xf32>
    %cst_16 = arith.constant dense<0.000000e+00> : vector<128xf32>
    %27 = vector.multi_reduction <add>, %26, %cst_16 [1] : vector<128x128xf32> to vector<128xf32>
    %28 = arith.mulf %13, %13 : vector<128x128xf32>
    %cst_17 = arith.constant dense<0.000000e+00> : vector<128xf32>
    %29 = vector.multi_reduction <add>, %28, %cst_17 [1] : vector<128x128xf32> to vector<128xf32>
    %30 = arith.mulf %25, %25 : vector<128x128xf32>
    %cst_18 = arith.constant dense<0.000000e+00> : vector<128xf32>
    %31 = vector.multi_reduction <add>, %30, %cst_18 [1] : vector<128x128xf32> to vector<128xf32>
    %32 = arith.mulf %2, %4 : vector<128x128xf32>
    %cst_19 = arith.constant dense<0.000000e+00> : vector<128xf32>
    %33 = vector.multi_reduction <add>, %32, %cst_19 [1] : vector<128x128xf32> to vector<128xf32>
    %34 = arith.mulf %2, %2 : vector<128x128xf32>
    %cst_20 = arith.constant dense<0.000000e+00> : vector<128xf32>
    %35 = vector.multi_reduction <add>, %34, %cst_20 [1] : vector<128x128xf32> to vector<128xf32>
    %36 = arith.mulf %4, %4 : vector<128x128xf32>
    %cst_21 = arith.constant dense<0.000000e+00> : vector<128xf32>
    %37 = vector.multi_reduction <add>, %36, %cst_21 [1] : vector<128x128xf32> to vector<128xf32>
    %38 = math.rsqrt %29 : vector<128xf32>
    %39 = arith.mulf %27, %38 : vector<128xf32>
    %40 = math.rsqrt %31 : vector<128xf32>
    %41 = arith.mulf %39, %40 : vector<128xf32>
    %42 = math.rsqrt %35 : vector<128xf32>
    %43 = arith.mulf %33, %42 : vector<128xf32>
    %44 = math.rsqrt %37 : vector<128xf32>
    %45 = arith.mulf %43, %44 : vector<128xf32>
    %46 = arith.addf %41, %45 : vector<128xf32>
    %47 = vector.shape_cast %46 : vector<128xf32> to vector<1x128xf32>
    %c0_22 = arith.constant 0 : index
    %c0_23 = arith.constant 0 : index
    %48 = vector.load %arg8[%c0_22, %c0_23] : memref<1x128xf32, #tpu.memory_space<vmem>>, vector<1x128xf32>
    tpu.vector_store %arg8[%c0_22, %c0_23], %47 {strides = array<i32>} : memref<1x128xf32, #tpu.memory_space<vmem>>, vector<1x128xf32>,
    return
  }
  func.func @transform_0(%arg0: i32) -> (i32, i32) {
    %c0_i32 = arith.constant 0 : i32
    %c0_i32_0 = arith.constant 0 : i32
    return %arg0, %c0_i32 : i32, i32
  }
  func.func @transform_1(%arg0: i32) -> (i32, i32) {
    %c0_i32 = arith.constant 0 : i32
    %c0_i32_0 = arith.constant 0 : i32
    return %arg0, %c0_i32 : i32, i32
  }
  func.func @transform_2(%arg0: i32) -> (i32, i32) {
    %c0_i32 = arith.constant 0 : i32
    %c0_i32_0 = arith.constant 0 : i32
    return %arg0, %c0_i32 : i32, i32
  }
  func.func @transform_3(%arg0: i32) -> (i32, i32) {
    %c0_i32 = arith.constant 0 : i32
    %c0_i32_0 = arith.constant 0 : i32
    %c0_i32_1 = arith.constant 0 : i32
    return %c0_i32, %c0_i32_0 : i32, i32
  }
  func.func @transform_4(%arg0: i32) -> (i32, i32) {
    %c0_i32 = arith.constant 0 : i32
    %c0_i32_0 = arith.constant 0 : i32
    %c0_i32_1 = arith.constant 0 : i32
    return %c0_i32, %c0_i32_0 : i32, i32
  }
  func.func @transform_5(%arg0: i32) -> (i32, i32) {
    %c0_i32 = arith.constant 0 : i32
    %c0_i32_0 = arith.constant 0 : i32
    %c0_i32_1 = arith.constant 0 : i32
    return %c0_i32, %c0_i32_0 : i32, i32
  }
  func.func @transform_6(%arg0: i32) -> (i32, i32) {
    %c0_i32 = arith.constant 0 : i32
    %c0_i32_0 = arith.constant 0 : i32
    %c0_i32_1 = arith.constant 0 : i32
    return %c0_i32, %c0_i32_0 : i32, i32
  }
  func.func @transform_7(%arg0: i32) -> (i32, i32) {
    %c0_i32 = arith.constant 0 : i32
    %c0_i32_0 = arith.constant 0 : i32
    return %c0_i32, %arg0 : i32, i32
  }
}

</mosaic_0001>

<llo_original>
// kernel: tpu_custom_call.1
$region0: #{tpu_custom_call.1}
  #allocation0 [shape = 'u32[]', space=smem, size = 0x4, offset = 0x4, fixed_abs, tag = 'smem constant byte address 0x4 - core index']
  #allocation1 [shape = 'u32[144,128]{1,0:T(1,128)}', space=vmem, size = 0x12000, scoped, tag = 'internal scratch']
  %s0 = inlined_call_operand.hbm [shape: bf16[128,128], index: 0, kind: input, shape index: {}]
  %s1 = inlined_call_operand.hbm [shape: bf16[128,128], index: 1, kind: input, shape index: {}]
  %s2 = inlined_call_operand.hbm [shape: bf16[128,128], index: 2, kind: input, shape index: {}]
  %s3 = inlined_call_operand.hbm [shape: bf16[128,256], index: 3, kind: input, shape index: {}]
  %s4 = inlined_call_operand.vmem [shape: f32[1,256], index: 4, kind: input, shape index: {}]
  %s5 = inlined_call_operand.hbm [shape: bf16[128,128], index: 5, kind: input, shape index: {}]
  %s6 = inlined_call_operand.vmem [shape: f32[1,128], index: 6, kind: input, shape index: {}]
  %s7 = inlined_call_operand.hbm [shape: f32[1,128], index: 7, kind: output, shape index: {}]
  %s8 = sld [smem:[#allocation0]]
  $region58: #{tpu_custom_call.1} parent=0
    _
  %s10 = ssub.s32 1, %s8
  %s11 = scalar_select 0, %s10, %s8
  $region1: #{tpu_custom_call.1} parent=0
    #allocation2 [shape = 'u8[32768]{0}', space=vmem, size = 0x8000, scoped, tag = 'input window, operand 0, single buffered']
    #allocation3 [shape = 's32[1]{0}', space=sflag, size = 0x4, scoped, tag = 'scoped memory for tpu_custom_call.1']
    #allocation4 [shape = 's32[1]{0}', space=sflag, size = 0x4, scoped, tag = 'scoped memory for tpu_custom_call.1']
    #allocation5 [shape = 'u8[32768]{0}', space=vmem, size = 0x8000, scoped, tag = 'input window, operand 1, single buffered']
    #allocation6 [shape = 's32[1]{0}', space=sflag, size = 0x4, scoped, tag = 'scoped memory for tpu_custom_call.1']
    #allocation7 [shape = 'u8[32768]{0}', space=vmem, size = 0x8000, scoped, tag = 'input window, operand 2, single buffered']
    #allocation8 [shape = 'u8[65536]{0}', space=vmem, size = 0x10000, scoped, tag = 'input window, operand 3, single buffered']
    #allocation9 [shape = 's32[1]{0}', space=sflag, size = 0x4, scoped, tag = 'scoped memory for tpu_custom_call.1']
    #allocation10 [shape = 'u8[32768]{0}', space=vmem, size = 0x8000, scoped, tag = 'input window, operand 5, single buffered']
    #allocation11 [shape = 'u8[512]{0}', space=vmem, size = 0x400, scoped, tag = 'output window, operand 0, single buffered']
    %12 = vsyncpa [#allocation3], 0
    %13 = vsyncpa [#allocation6], 0
    %14 = vsyncpa [#allocation9], 0
    %15 = vsyncpa [#allocation4], 0
    // Predicated region
    $region2: #{tpu_custom_call.1} parent=1 // pred_check
      _
    $region3: #{tpu_custom_call.1} parent=1 // pred_check_branch
      %17 = sbr.rel (0) target = $region5
    $region4: #{tpu_custom_call.1} parent=1 // pred_region
      %s19 = ssub.s32 1024, 1024
      %20 = vsyncadd [#allocation3], %s19
      %s21 = sshll.u32 [#allocation2], 4
      %s22 = int_to_ptr.vmem [resolvable:$true] %s21
      %27 = dma.hbm_to_vmem [thread:$0]  %s0, 1024, %s22, [#allocation3], 64, 64, 4
    $region5: #{tpu_custom_call.1} parent=1 // pred_fallthru
      _
    // Predicated region
    $region6: #{tpu_custom_call.1} parent=1 // pred_check
      _
    $region7: #{tpu_custom_call.1} parent=1 // pred_check_branch
      %29 = sbr.rel (0) target = $region9
    $region8: #{tpu_custom_call.1} parent=1 // pred_region
      %s31 = ssub.s32 1024, 1024
      %32 = vsyncadd [#allocation6], %s31
      %s33 = sshll.u32 [#allocation5], 4
      %s34 = int_to_ptr.vmem [resolvable:$true] %s33
      %39 = dma.hbm_to_vmem [thread:$0]  %s1, 1024, %s34, [#allocation6], 64, 64, 4
    $region9: #{tpu_custom_call.1} parent=1 // pred_fallthru
      _
    // Predicated region
    $region10: #{tpu_custom_call.1} parent=1 // pred_check
      _
    $region11: #{tpu_custom_call.1} parent=1 // pred_check_branch
      %41 = sbr.rel (0) target = $region13
    $region12: #{tpu_custom_call.1} parent=1 // pred_region
      %s43 = ssub.s32 1024, 1024
      %44 = vsyncadd [#allocation6], %s43
      %s45 = sshll.u32 [#allocation7], 4
      %s46 = int_to_ptr.vmem [resolvable:$true] %s45
      %51 = dma.hbm_to_vmem [thread:$0]  %s2, 1024, %s46, [#allocation6], 64, 64, 4
    $region13: #{tpu_custom_call.1} parent=1 // pred_fallthru
      _
    // Predicated region
    $region14: #{tpu_custom_call.1} parent=1 // pred_check
      _
    $region15: #{tpu_custom_call.1} parent=1 // pred_check_branch
      %53 = sbr.rel (0) target = $region17
    $region16: #{tpu_custom_call.1} parent=1 // pred_region
      %s55 = ssub.s32 2048, 2048
      %56 = vsyncadd [#allocation9], %s55
      %s57 = sshll.u32 [#allocation8], 4
      %s58 = int_to_ptr.vmem [resolvable:$true] %s57
      %63 = dma.hbm_to_vmem [thread:$0]  %s3, 2048, %s58, [#allocation9], 128, 128, 8
    $region17: #{tpu_custom_call.1} parent=1 // pred_fallthru
      _
    // Predicated region
    $region18: #{tpu_custom_call.1} parent=1 // pred_check
      _
    $region19: #{tpu_custom_call.1} parent=1 // pred_check_branch
      %65 = sbr.rel (0) target = $region21
    $region20: #{tpu_custom_call.1} parent=1 // pred_region
      _
    $region21: #{tpu_custom_call.1} parent=1 // pred_fallthru
      _
    // Predicated region
    $region22: #{tpu_custom_call.1} parent=1 // pred_check
      _
    $region23: #{tpu_custom_call.1} parent=1 // pred_check_branch
      %67 = sbr.rel (0) target = $region25
    $region24: #{tpu_custom_call.1} parent=1 // pred_region
      %s69 = ssub.s32 1024, 1024
      %70 = vsyncadd [#allocation9], %s69
      %s71 = sshll.u32 [#allocation10], 4
      %s72 = int_to_ptr.vmem [resolvable:$true] %s71
      %77 = dma.hbm_to_vmem [thread:$0]  %s5, 1024, %s72, [#allocation9], 64, 64, 4
    $region25: #{tpu_custom_call.1} parent=1 // pred_fallthru
      _
    // Predicated region
    $region26: #{tpu_custom_call.1} parent=1 // pred_check
      _
    $region27: #{tpu_custom_call.1} parent=1 // pred_check_branch
      %79 = sbr.rel (0) target = $region29
    $region28: #{tpu_custom_call.1} parent=1 // pred_region
      _
    $region29: #{tpu_custom_call.1} parent=1 // pred_fallthru
      _
    // Predicated region
    $region30: #{tpu_custom_call.1} parent=1 // pred_check
      _
    $region31: #{tpu_custom_call.1} parent=1 // pred_check_branch
      %81 = sbr.rel (0) target = $region33
    $region32: #{tpu_custom_call.1} parent=1 // pred_region
      %82 = dma.done [#allocation3], 1024
    $region33: #{tpu_custom_call.1} parent=1 // pred_fallthru
      _
    // Predicated region
    $region34: #{tpu_custom_call.1} parent=1 // pred_check
      _
    $region35: #{tpu_custom_call.1} parent=1 // pred_check_branch
      %84 = sbr.rel (0) target = $region37
    $region36: #{tpu_custom_call.1} parent=1 // pred_region
      %85 = dma.done [#allocation6], 1024
    $region37: #{tpu_custom_call.1} parent=1 // pred_fallthru
      _
    // Predicated region
    $region38: #{tpu_custom_call.1} parent=1 // pred_check
      _
    $region39: #{tpu_custom_call.1} parent=1 // pred_check_branch
      %87 = sbr.rel (0) target = $region41
    $region40: #{tpu_custom_call.1} parent=1 // pred_region
      %88 = dma.done [#allocation6], 1024
    $region41: #{tpu_custom_call.1} parent=1 // pred_fallthru
      _
    // Predicated region
    $region42: #{tpu_custom_call.1} parent=1 // pred_check
      _
    $region43: #{tpu_custom_call.1} parent=1 // pred_check_branch
      %90 = sbr.rel (0) target = $region45
    $region44: #{tpu_custom_call.1} parent=1 // pred_region
      %91 = dma.done [#allocation9], 2048
    $region45: #{tpu_custom_call.1} parent=1 // pred_fallthru
      _
    // Predicated region
    $region46: #{tpu_custom_call.1} parent=1 // pred_check
      _
    $region47: #{tpu_custom_call.1} parent=1 // pred_check_branch
      %93 = sbr.rel (0) target = $region49
    $region48: #{tpu_custom_call.1} parent=1 // pred_region
      %94 = dma.done [#allocation9], 1024
    $region49: #{tpu_custom_call.1} parent=1 // pred_fallthru
      _
    %v96 = vld [vmem:[#allocation5] sm:$0xf]
    %v97 = vld [vmem:[#allocation5 + $0x4] sm:$0xf]
    %v98 = vld [vmem:[#allocation5 + $0x8] sm:$0xf]
    %v99 = vld [vmem:[#allocation5 + $0xc] sm:$0xf]
    %v100 = vld [vmem:[#allocation5 + $0x10] sm:$0xf]
    %v101 = vld [vmem:[#allocation5 + $0x14] sm:$0xf]
    %v102 = vld [vmem:[#allocation5 + $0x18] sm:$0xf]
    %v103 = vld [vmem:[#allocation5 + $0x1c] sm:$0xf]
    %v104 = vld [vmem:[#allocation5 + $0x20] sm:$0xf]
    %v105 = vld [vmem:[#allocation5 + $0x24] sm:$0xf]
    %v106 = vld [vmem:[#allocation5 + $0x28] sm:$0xf]
    %v107 = vld [vmem:[#allocation5 + $0x2c] sm:$0xf]
    %v108 = vld [vmem:[#allocation5 + $0x30] sm:$0xf]
    %v109 = vld [vmem:[#allocation5 + $0x34] sm:$0xf]
    %v110 = vld [vmem:[#allocation5 + $0x38] sm:$0xf]
    %v111 = vld [vmem:[#allocation5 + $0x3c] sm:$0xf]
    %v112 = vld [vmem:[#allocation2] sm:$0xf]
    %v113 = vld [vmem:[#allocation2 + $0x4] sm:$0xf]
    %v114 = vld [vmem:[#allocation2 + $0x8] sm:$0xf]
    %v115 = vld [vmem:[#allocation2 + $0xc] sm:$0xf]
    %v116 = vld [vmem:[#allocation2 + $0x10] sm:$0xf]
    %v117 = vld [vmem:[#allocation2 + $0x14] sm:$0xf]
    %v118 = vld [vmem:[#allocation2 + $0x18] sm:$0xf]
    %v119 = vld [vmem:[#allocation2 + $0x1c] sm:$0xf]
    %v120 = vld [vmem:[#allocation2 + $0x20] sm:$0xf]
    %v121 = vld [vmem:[#allocation2 + $0x24] sm:$0xf]
    %v122 = vld [vmem:[#allocation2 + $0x28] sm:$0xf]
    %v123 = vld [vmem:[#allocation2 + $0x2c] sm:$0xf]
    %v124 = vld [vmem:[#allocation2 + $0x30] sm:$0xf]
    %v125 = vld [vmem:[#allocation2 + $0x34] sm:$0xf]
    %v126 = vld [vmem:[#allocation2 + $0x38] sm:$0xf]
    %v127 = vld [vmem:[#allocation2 + $0x3c] sm:$0xf]
    %v128 = vunpack.c.l.bf16 %v112
    %v129 = vunpack.c.l.bf16 %v113
    %v130 = vunpack.c.l.bf16 %v114
    %v131 = vunpack.c.l.bf16 %v115
    %v132 = vunpack.c.l.bf16 %v116
    %v133 = vunpack.c.l.bf16 %v117
    %v134 = vunpack.c.l.bf16 %v118
    %v135 = vunpack.c.l.bf16 %v119
    %v136 = vunpack.c.l.bf16 %v120
    %v137 = vunpack.c.l.bf16 %v121
    %v138 = vunpack.c.l.bf16 %v122
    %v139 = vunpack.c.l.bf16 %v123
    %v140 = vunpack.c.l.bf16 %v124
    %v141 = vunpack.c.l.bf16 %v125
    %v142 = vunpack.c.l.bf16 %v126
    %v143 = vunpack.c.l.bf16 %v127
    %v144 = vld [vmem:[#allocation7] sm:$0xf]
    %v145 = vld [vmem:[#allocation7 + $0x4] sm:$0xf]
    %v146 = vld [vmem:[#allocation7 + $0x8] sm:$0xf]
    %v147 = vld [vmem:[#allocation7 + $0xc] sm:$0xf]
    %v148 = vld [vmem:[#allocation7 + $0x10] sm:$0xf]
    %v149 = vld [vmem:[#allocation7 + $0x14] sm:$0xf]
    %v150 = vld [vmem:[#allocation7 + $0x18] sm:$0xf]
    %v151 = vld [vmem:[#allocation7 + $0x1c] sm:$0xf]
    %v152 = vld [vmem:[#allocation7 + $0x20] sm:$0xf]
    %v153 = vld [vmem:[#allocation7 + $0x24] sm:$0xf]
    %v154 = vld [vmem:[#allocation7 + $0x28] sm:$0xf]
    %v155 = vld [vmem:[#allocation7 + $0x2c] sm:$0xf]
    %v156 = vld [vmem:[#allocation7 + $0x30] sm:$0xf]
    %v157 = vld [vmem:[#allocation7 + $0x34] sm:$0xf]
    %v158 = vld [vmem:[#allocation7 + $0x38] sm:$0xf]
    %v159 = vld [vmem:[#allocation7 + $0x3c] sm:$0xf]
    %v160 = vunpack.c.l.bf16 %v144
    %v161 = vunpack.c.l.bf16 %v145
    %v162 = vunpack.c.l.bf16 %v146
    %v163 = vunpack.c.l.bf16 %v147
    %v164 = vunpack.c.l.bf16 %v148
    %v165 = vunpack.c.l.bf16 %v149
    %v166 = vunpack.c.l.bf16 %v150
    %v167 = vunpack.c.l.bf16 %v151
    %v168 = vunpack.c.l.bf16 %v152
    %v169 = vunpack.c.l.bf16 %v153
    %v170 = vunpack.c.l.bf16 %v154
    %v171 = vunpack.c.l.bf16 %v155
    %v172 = vunpack.c.l.bf16 %v156
    %v173 = vunpack.c.l.bf16 %v157
    %v174 = vunpack.c.l.bf16 %v158
    %v175 = vunpack.c.l.bf16 %v159
    %v176 = vld [vmem:[#allocation8] sm:$0xff]
    %v177 = vld [vmem:[#allocation8 + $0x8] sm:$0xff]
    %v178 = vld [vmem:[#allocation8 + $0x10] sm:$0xff]
    %v179 = vld [vmem:[#allocation8 + $0x18] sm:$0xff]
    %v180 = vld [vmem:[#allocation8 + $0x20] sm:$0xff]
    %v181 = vld [vmem:[#allocation8 + $0x28] sm:$0xff]
    %v182 = vld [vmem:[#allocation8 + $0x30] sm:$0xff]
    %v183 = vld [vmem:[#allocation8 + $0x38] sm:$0xff]
    %v184 = vld [vmem:[#allocation8 + $0x40] sm:$0xff]
    %v185 = vld [vmem:[#allocation8 + $0x48] sm:$0xff]
    %v186 = vld [vmem:[#allocation8 + $0x50] sm:$0xff]
    %v187 = vld [vmem:[#allocation8 + $0x58] sm:$0xff]
    %v188 = vld [vmem:[#allocation8 + $0x60] sm:$0xff]
    %v189 = vld [vmem:[#allocation8 + $0x68] sm:$0xff]
    %v190 = vld [vmem:[#allocation8 + $0x70] sm:$0xff]
    %v191 = vld [vmem:[#allocation8 + $0x78] sm:$0xff]
    %v192 = vld [vmem:[%s4] sm:$0x3]
    %v194 = vlaneseq
    %v195 = vshrl.u32 %v194, 7
    %v196 = vsub.s32 0, %v195
    %v197 = vrot.slane %v192, %v196
    %v198 = vlaneseq
    %v199 = vshrl.u32 %v198, 7
    %v200 = vsub.s32 1, %v199
    %v201 = vrot.slane %v192, %v200
    %v220 = vunpack.c.l.b16 %v96
    %v221 = vunpack.c.l.b16 %v97
    %v222 = vunpack.c.l.b16 %v98
    %v223 = vunpack.c.l.b16 %v99
    %v224 = vunpack.c.l.b16 %v100
    %v225 = vunpack.c.l.b16 %v101
    %v226 = vunpack.c.l.b16 %v102
    %v227 = vunpack.c.l.b16 %v103
    %v228 = vunpack.c.l.b16 %v104
    %v229 = vunpack.c.l.b16 %v105
    %v230 = vunpack.c.l.b16 %v106
    %v231 = vunpack.c.l.b16 %v107
    %v232 = vunpack.c.l.b16 %v108
    %v233 = vunpack.c.l.b16 %v109
    %v234 = vunpack.c.l.b16 %v110
    %v235 = vunpack.c.l.b16 %v111
    %v236 = vpack.c.b16 %v221, %v220
    %v237 = vpack.c.b16 %v223, %v222
    %v238 = vpack.c.b16 %v225, %v224
    %v239 = vpack.c.b16 %v227, %v226
    %v240 = vpack.c.b16 %v229, %v228
    %v241 = vpack.c.b16 %v231, %v230
    %v242 = vpack.c.b16 %v233, %v232
    %v243 = vpack.c.b16 %v235, %v234
    %v268 = vunpack.c.l.b16 %v176
    %v269 = vunpack.c.h.b16 %v176
    %v270 = vunpack.c.l.b16 %v177
    %v271 = vunpack.c.h.b16 %v177
    %v272 = vunpack.c.l.b16 %v178
    %v273 = vunpack.c.h.b16 %v178
    %v274 = vunpack.c.l.b16 %v179
    %v275 = vunpack.c.h.b16 %v179
    %v276 = vunpack.c.l.b16 %v180
    %v277 = vunpack.c.h.b16 %v180
    %v278 = vunpack.c.l.b16 %v181
    %v279 = vunpack.c.h.b16 %v181
    %v280 = vunpack.c.l.b16 %v182
    %v281 = vunpack.c.h.b16 %v182
    %v282 = vunpack.c.l.b16 %v183
    %v283 = vunpack.c.h.b16 %v183
    %v284 = vunpack.c.l.b16 %v184
    %v285 = vunpack.c.h.b16 %v184
    %v286 = vunpack.c.l.b16 %v185
    %v287 = vunpack.c.h.b16 %v185
    %v288 = vunpack.c.l.b16 %v186
    %v289 = vunpack.c.h.b16 %v186
    %v290 = vunpack.c.l.b16 %v187
    %v291 = vunpack.c.h.b16 %v187
    %v292 = vunpack.c.l.b16 %v188
    %v293 = vunpack.c.h.b16 %v188
    %v294 = vunpack.c.l.b16 %v189
    %v295 = vunpack.c.h.b16 %v189
    %v296 = vunpack.c.l.b16 %v190
    %v297 = vunpack.c.h.b16 %v190
    %v298 = vunpack.c.l.b16 %v191
    %v299 = vunpack.c.h.b16 %v191
    %v300 = vpack.c.b16 %v270, %v268
    %v301 = vpack.c.b16 %v271, %v269
    %v302 = vpack.c.b16 %v274, %v272
    %v303 = vpack.c.b16 %v275, %v273
    %v304 = vpack.c.b16 %v278, %v276
    %v305 = vpack.c.b16 %v279, %v277
    %v306 = vpack.c.b16 %v282, %v280
    %v307 = vpack.c.b16 %v283, %v281
    %v308 = vpack.c.b16 %v286, %v284
    %v309 = vpack.c.b16 %v287, %v285
    %v310 = vpack.c.b16 %v290, %v288
    %v311 = vpack.c.b16 %v291, %v289
    %v312 = vpack.c.b16 %v294, %v292
    %v313 = vpack.c.b16 %v295, %v293
    %v314 = vpack.c.b16 %v298, %v296
    %v315 = vpack.c.b16 %v299, %v297
    %332 = vmatprep.subr.bf16.mxu0 %v301
    %333 = vmatpush1.bf16.msra.mxu0 %v300
    %334 = vmatprep.subr.bf16.mxu0 %v303
    %335 = vmatpush1.bf16.msra.mxu0 %v302
    %336 = vmatprep.subr.bf16.mxu0 %v305
    %337 = vmatpush1.bf16.msra.mxu0 %v304
    %338 = vmatprep.subr.bf16.mxu0 %v307
    %339 = vmatpush1.bf16.msra.mxu0 %v306
    %340 = vmatprep.subr.bf16.mxu0 %v309
    %341 = vmatpush1.bf16.msra.mxu0 %v308
    %342 = vmatprep.subr.bf16.mxu0 %v311
    %343 = vmatpush1.bf16.msra.mxu0 %v310
    %344 = vmatprep.subr.bf16.mxu0 %v313
    %345 = vmatpush1.bf16.msra.mxu0 %v312
    %346 = vmatprep.subr.bf16.mxu0 %v315
    %347 = vmatpush1.bf16.msra.mxu0 %v314
    %348 = vmatprep.subr.bf16.mxu0 0
    %349 = vmatpush1.bf16.msra.mxu0 0
    %350 = vmatprep.subr.bf16.mxu0 0
    %351 = vmatpush1.bf16.msra.mxu0 0
    %352 = vmatprep.subr.bf16.mxu0 0
    %353 = vmatpush1.bf16.msra.mxu0 0
    %354 = vmatprep.subr.bf16.mxu0 0
    %355 = vmatpush1.bf16.msra.mxu0 0
    %356 = vmatprep.subr.bf16.mxu0 0
    %357 = vmatpush1.bf16.msra.mxu0 0
    %358 = vmatprep.subr.bf16.mxu0 0
    %359 = vmatpush1.bf16.msra.mxu0 0
    %360 = vmatprep.subr.bf16.mxu0 0
    %361 = vmatpush1.bf16.msra.mxu0 0
    %362 = vmatprep.subr.bf16.mxu0 0
    %363 = vmatpush1.bf16.msra.mxu0 0
    %364 = vmatprep.mubr.bf16.mxu0 0
    %365 = vmatmul.mubr.bf16.gmra.mrb[0].mxu0 %v236
    %v366 = vpop.f32.mrb[0].mxu0
    %v367 = vadd.f32 %v197, %v366
    %v368 = vpop.f32.mrb[0].mxu0
    %v369 = vadd.f32 %v201, %v368
    %v370 = vpop.f32.mrb[0].mxu0
    %v371 = vadd.f32 %v197, %v370
    %v372 = vpop.f32.mrb[0].mxu0
    %v373 = vadd.f32 %v201, %v372
    %374 = vmatprep.mubr.bf16.mxu0 0
    %375 = vmatmul.mubr.bf16.gmra.mrb[0].mxu0 %v237
    %v376 = vpop.f32.mrb[0].mxu0
    %v377 = vadd.f32 %v197, %v376
    %v378 = vpop.f32.mrb[0].mxu0
    %v379 = vadd.f32 %v201, %v378
    %v380 = vpop.f32.mrb[0].mxu0
    %v381 = vadd.f32 %v197, %v380
    %v382 = vpop.f32.mrb[0].mxu0
    %v383 = vadd.f32 %v201, %v382
    %384 = vmatprep.mubr.bf16.mxu0 0
    %385 = vmatmul.mubr.bf16.gmra.mrb[0].mxu0 %v238
    %v386 = vpop.f32.mrb[0].mxu0
    %v387 = vadd.f32 %v197, %v386
    %v388 = vpop.f32.mrb[0].mxu0
    %v389 = vadd.f32 %v201, %v388
    %v390 = vpop.f32.mrb[0].mxu0
    %v391 = vadd.f32 %v197, %v390
    %v392 = vpop.f32.mrb[0].mxu0
    %v393 = vadd.f32 %v201, %v392
    %394 = vmatprep.mubr.bf16.mxu0 0
    %395 = vmatmul.mubr.bf16.gmra.mrb[0].mxu0 %v239
    %v396 = vpop.f32.mrb[0].mxu0
    %v397 = vadd.f32 %v197, %v396
    %v398 = vpop.f32.mrb[0].mxu0
    %v399 = vadd.f32 %v201, %v398
    %v400 = vpop.f32.mrb[0].mxu0
    %v401 = vadd.f32 %v197, %v400
    %v402 = vpop.f32.mrb[0].mxu0
    %v403 = vadd.f32 %v201, %v402
    %404 = vmatprep.mubr.bf16.mxu0 0
    %405 = vmatmul.mubr.bf16.gmra.mrb[0].mxu0 %v240
    %v406 = vpop.f32.mrb[0].mxu0
    %v407 = vadd.f32 %v197, %v406
    %v408 = vpop.f32.mrb[0].mxu0
    %v409 = vadd.f32 %v201, %v408
    %v410 = vpop.f32.mrb[0].mxu0
    %v411 = vadd.f32 %v197, %v410
    %v412 = vpop.f32.mrb[0].mxu0
    %v413 = vadd.f32 %v201, %v412
    %414 = vmatprep.mubr.bf16.mxu0 0
    %415 = vmatmul.mubr.bf16.gmra.mrb[0].mxu0 %v241
    %v416 = vpop.f32.mrb[0].mxu0
    %v417 = vadd.f32 %v197, %v416
    %v418 = vpop.f32.mrb[0].mxu0
    %v419 = vadd.f32 %v201, %v418
    %v420 = vpop.f32.mrb[0].mxu0
    %v421 = vadd.f32 %v197, %v420
    %v422 = vpop.f32.mrb[0].mxu0
    %v423 = vadd.f32 %v201, %v422
    %424 = vmatprep.mubr.bf16.mxu0 0
    %425 = vmatmul.mubr.bf16.gmra.mrb[0].mxu0 %v242
    %v426 = vpop.f32.mrb[0].mxu0
    %v427 = vadd.f32 %v197, %v426
    %v428 = vpop.f32.mrb[0].mxu0
    %v429 = vadd.f32 %v201, %v428
    %v430 = vpop.f32.mrb[0].mxu0
    %v431 = vadd.f32 %v197, %v430
    %v432 = vpop.f32.mrb[0].mxu0
    %v433 = vadd.f32 %v201, %v432
    %434 = vmatprep.mubr.bf16.mxu0 0
    %435 = vmatmul.mubr.bf16.gmra.mrb[0].mxu0 %v243
    %v436 = vpop.f32.mrb[0].mxu0
    %v437 = vadd.f32 %v197, %v436
    %v438 = vpop.f32.mrb[0].mxu0
    %v439 = vadd.f32 %v201, %v438
    %v440 = vpop.f32.mrb[0].mxu0
    %v441 = vadd.f32 %v197, %v440
    %v442 = vpop.f32.mrb[0].mxu0
    %v443 = vadd.f32 %v201, %v442
    %444 = vdwg.mxu0
    %v445 = vmax.f32 %v367, 0.0
    %v446 = vmax.f32 %v371, 0.0
    %v447 = vmax.f32 %v377, 0.0
    %v448 = vmax.f32 %v381, 0.0
    %v449 = vmax.f32 %v387, 0.0
    %v450 = vmax.f32 %v391, 0.0
    %v451 = vmax.f32 %v397, 0.0
    %v452 = vmax.f32 %v401, 0.0
    %v453 = vmax.f32 %v407, 0.0
    %v454 = vmax.f32 %v411, 0.0
    %v455 = vmax.f32 %v417, 0.0
    %v456 = vmax.f32 %v421, 0.0
    %v457 = vmax.f32 %v427, 0.0
    %v458 = vmax.f32 %v431, 0.0
    %v459 = vmax.f32 %v437, 0.0
    %v460 = vmax.f32 %v441, 0.0
    %v461 = vpack.c.bf16 %v446, %v445
    %v462 = vpack.c.bf16 %v448, %v447
    %v463 = vpack.c.bf16 %v450, %v449
    %v464 = vpack.c.bf16 %v452, %v451
    %v465 = vpack.c.bf16 %v454, %v453
    %v466 = vpack.c.bf16 %v456, %v455
    %v467 = vpack.c.bf16 %v458, %v457
    %v468 = vpack.c.bf16 %v460, %v459
    %v469 = vld [vmem:[#allocation10] sm:$0xf]
    %v470 = vld [vmem:[#allocation10 + $0x4] sm:$0xf]
    %v471 = vld [vmem:[#allocation10 + $0x8] sm:$0xf]
    %v472 = vld [vmem:[#allocation10 + $0xc] sm:$0xf]
    %v473 = vld [vmem:[#allocation10 + $0x10] sm:$0xf]
    %v474 = vld [vmem:[#allocation10 + $0x14] sm:$0xf]
    %v475 = vld [vmem:[#allocation10 + $0x18] sm:$0xf]
    %v476 = vld [vmem:[#allocation10 + $0x1c] sm:$0xf]
    %v477 = vld [vmem:[#allocation10 + $0x20] sm:$0xf]
    %v478 = vld [vmem:[#allocation10 + $0x24] sm:$0xf]
    %v479 = vld [vmem:[#allocation10 + $0x28] sm:$0xf]
    %v480 = vld [vmem:[#allocation10 + $0x2c] sm:$0xf]
    %v481 = vld [vmem:[#allocation10 + $0x30] sm:$0xf]
    %v482 = vld [vmem:[#allocation10 + $0x34] sm:$0xf]
    %v483 = vld [vmem:[#allocation10 + $0x38] sm:$0xf]
    %v484 = vld [vmem:[#allocation10 + $0x3c] sm:$0xf]
    %v485 = vld [vmem:[%s6] sm:$0x1]
    %v487 = vlaneseq
    %v488 = vshrl.u32 %v487, 7
    %v489 = vsub.s32 0, %v488
    %v490 = vrot.slane %v485, %v489
    %v508 = vunpack.c.l.b16 %v469
    %v509 = vunpack.c.l.b16 %v470
    %v510 = vunpack.c.l.b16 %v471
    %v511 = vunpack.c.l.b16 %v472
    %v512 = vunpack.c.l.b16 %v473
    %v513 = vunpack.c.l.b16 %v474
    %v514 = vunpack.c.l.b16 %v475
    %v515 = vunpack.c.l.b16 %v476
    %v516 = vunpack.c.l.b16 %v477
    %v517 = vunpack.c.l.b16 %v478
    %v518 = vunpack.c.l.b16 %v479
    %v519 = vunpack.c.l.b16 %v480
    %v520 = vunpack.c.l.b16 %v481
    %v521 = vunpack.c.l.b16 %v482
    %v522 = vunpack.c.l.b16 %v483
    %v523 = vunpack.c.l.b16 %v484
    %v524 = vpack.c.b16 %v509, %v508
    %v525 = vpack.c.b16 %v511, %v510
    %v526 = vpack.c.b16 %v513, %v512
    %v527 = vpack.c.b16 %v515, %v514
    %v528 = vpack.c.b16 %v517, %v516
    %v529 = vpack.c.b16 %v519, %v518
    %v530 = vpack.c.b16 %v521, %v520
    %v531 = vpack.c.b16 %v523, %v522
    %540 = vmatprep.subr.bf16.mxu0 0
    %541 = vmatpush1.bf16.msra.mxu0 %v524
    %542 = vmatprep.subr.bf16.mxu0 0
    %543 = vmatpush1.bf16.msra.mxu0 %v525
    %544 = vmatprep.subr.bf16.mxu0 0
    %545 = vmatpush1.bf16.msra.mxu0 %v526
    %546 = vmatprep.subr.bf16.mxu0 0
    %547 = vmatpush1.bf16.msra.mxu0 %v527
    %548 = vmatprep.subr.bf16.mxu0 0
    %549 = vmatpush1.bf16.msra.mxu0 %v528
    %550 = vmatprep.subr.bf16.mxu0 0
    %551 = vmatpush1.bf16.msra.mxu0 %v529
    %552 = vmatprep.subr.bf16.mxu0 0
    %553 = vmatpush1.bf16.msra.mxu0 %v530
    %554 = vmatprep.subr.bf16.mxu0 0
    %555 = vmatpush1.bf16.msra.mxu0 %v531
    %556 = vmatprep.subr.bf16.mxu0 0
    %557 = vmatpush1.bf16.msra.mxu0 0
    %558 = vmatprep.subr.bf16.mxu0 0
    %559 = vmatpush1.bf16.msra.mxu0 0
    %560 = vmatprep.subr.bf16.mxu0 0
    %561 = vmatpush1.bf16.msra.mxu0 0
    %562 = vmatprep.subr.bf16.mxu0 0
    %563 = vmatpush1.bf16.msra.mxu0 0
    %564 = vmatprep.subr.bf16.mxu0 0
    %565 = vmatpush1.bf16.msra.mxu0 0
    %566 = vmatprep.subr.bf16.mxu0 0
    %567 = vmatpush1.bf16.msra.mxu0 0
    %568 = vmatprep.subr.bf16.mxu0 0
    %569 = vmatpush1.bf16.msra.mxu0 0
    %570 = vmatprep.subr.bf16.mxu0 0
    %571 = vmatpush1.bf16.msra.mxu0 0
    %572 = vmatprep.mubr.bf16.mxu0 0
    %573 = vmatmul.mubr.bf16.gmra.mrb[0].mxu0 %v461
    %v574 = vpop.f32.mrb[0].mxu0
    %v575 = vadd.f32 %v490, %v574
    %v576 = vpop.f32.mrb[0].mxu0
    %v577 = vpop.f32.mrb[0].mxu0
    %v578 = vadd.f32 %v490, %v577
    %v579 = vpop.f32.mrb[0].mxu0
    %580 = vmatprep.mubr.bf16.mxu0 0
    %581 = vmatmul.mubr.bf16.gmra.mrb[0].mxu0 %v462
    %v582 = vpop.f32.mrb[0].mxu0
    %v583 = vadd.f32 %v490, %v582
    %v584 = vpop.f32.mrb[0].mxu0
    %v585 = vpop.f32.mrb[0].mxu0
    %v586 = vadd.f32 %v490, %v585
    %v587 = vpop.f32.mrb[0].mxu0
    %588 = vmatprep.mubr.bf16.mxu0 0
    %589 = vmatmul.mubr.bf16.gmra.mrb[0].mxu0 %v463
    %v590 = vpop.f32.mrb[0].mxu0
    %v591 = vadd.f32 %v490, %v590
    %v592 = vpop.f32.mrb[0].mxu0
    %v593 = vpop.f32.mrb[0].mxu0
    %v594 = vadd.f32 %v490, %v593
    %v595 = vpop.f32.mrb[0].mxu0
    %596 = vmatprep.mubr.bf16.mxu0 0
    %597 = vmatmul.mubr.bf16.gmra.mrb[0].mxu0 %v464
    %v598 = vpop.f32.mrb[0].mxu0
    %v599 = vadd.f32 %v490, %v598
    %v600 = vpop.f32.mrb[0].mxu0
    %v601 = vpop.f32.mrb[0].mxu0
    %v602 = vadd.f32 %v490, %v601
    %v603 = vpop.f32.mrb[0].mxu0
    %604 = vmatprep.mubr.bf16.mxu0 0
    %605 = vmatmul.mubr.bf16.gmra.mrb[0].mxu0 %v465
    %v606 = vpop.f32.mrb[0].mxu0
    %v607 = vadd.f32 %v490, %v606
    %v608 = vpop.f32.mrb[0].mxu0
    %v609 = vpop.f32.mrb[0].mxu0
    %v610 = vadd.f32 %v490, %v609
    %v611 = vpop.f32.mrb[0].mxu0
    %612 = vmatprep.mubr.bf16.mxu0 0
    %613 = vmatmul.mubr.bf16.gmra.mrb[0].mxu0 %v466
    %v614 = vpop.f32.mrb[0].mxu0
    %v615 = vadd.f32 %v490, %v614
    %v616 = vpop.f32.mrb[0].mxu0
    %v617 = vpop.f32.mrb[0].mxu0
    %v618 = vadd.f32 %v490, %v617
    %v619 = vpop.f32.mrb[0].mxu0
    %620 = vmatprep.mubr.bf16.mxu0 0
    %621 = vmatmul.mubr.bf16.gmra.mrb[0].mxu0 %v467
    %v622 = vpop.f32.mrb[0].mxu0
    %v623 = vadd.f32 %v490, %v622
    %v624 = vpop.f32.mrb[0].mxu0
    %v625 = vpop.f32.mrb[0].mxu0
    %v626 = vadd.f32 %v490, %v625
    %v627 = vpop.f32.mrb[0].mxu0
    %628 = vmatprep.mubr.bf16.mxu0 0
    %629 = vmatmul.mubr.bf16.gmra.mrb[0].mxu0 %v468
    %v630 = vpop.f32.mrb[0].mxu0
    %v631 = vadd.f32 %v490, %v630
    %v632 = vpop.f32.mrb[0].mxu0
    %v633 = vpop.f32.mrb[0].mxu0
    %v634 = vadd.f32 %v490, %v633
    %v635 = vpop.f32.mrb[0].mxu0
    %636 = vdwg.mxu0
    %637 = vmax.xlane.f32.xlu0 %v575
    %v638 = vpop.xlane.xlu0 %637
    %639 = vmax.xlane.f32.xlu0 %v578
    %v640 = vpop.xlane.xlu0 %639
    %641 = vmax.xlane.f32.xlu0 %v583
    %v642 = vpop.xlane.xlu0 %641
    %643 = vmax.xlane.f32.xlu0 %v586
    %v644 = vpop.xlane.xlu0 %643
    %645 = vmax.xlane.f32.xlu0 %v591
    %v646 = vpop.xlane.xlu0 %645
    %647 = vmax.xlane.f32.xlu0 %v594
    %v648 = vpop.xlane.xlu0 %647
    %649 = vmax.xlane.f32.xlu0 %v599
    %v650 = vpop.xlane.xlu0 %649
    %651 = vmax.xlane.f32.xlu0 %v602
    %v652 = vpop.xlane.xlu0 %651
    %653 = vmax.xlane.f32.xlu0 %v607
    %v654 = vpop.xlane.xlu0 %653
    %655 = vmax.xlane.f32.xlu0 %v610
    %v656 = vpop.xlane.xlu0 %655
    %657 = vmax.xlane.f32.xlu0 %v615
    %v658 = vpop.xlane.xlu0 %657
    %659 = vmax.xlane.f32.xlu0 %v618
    %v660 = vpop.xlane.xlu0 %659
    %661 = vmax.xlane.f32.xlu0 %v623
    %v662 = vpop.xlane.xlu0 %661
    %663 = vmax.xlane.f32.xlu0 %v626
    %v664 = vpop.xlane.xlu0 %663
    %665 = vmax.xlane.f32.xlu0 %v631
    %v666 = vpop.xlane.xlu0 %665
    %667 = vmax.xlane.f32.xlu0 %v634
    %v668 = vpop.xlane.xlu0 %667
    %v669 = vsub.f32 %v575, %v638
    %v670 = vsub.f32 %v578, %v640
    %v671 = vsub.f32 %v583, %v642
    %v672 = vsub.f32 %v586, %v644
    %v673 = vsub.f32 %v591, %v646
    %v674 = vsub.f32 %v594, %v648
    %v675 = vsub.f32 %v599, %v650
    %v676 = vsub.f32 %v602, %v652
    %v677 = vsub.f32 %v607, %v654
    %v678 = vsub.f32 %v610, %v656
    %v679 = vsub.f32 %v615, %v658
    %v680 = vsub.f32 %v618, %v660
    %v681 = vsub.f32 %v623, %v662
    %v682 = vsub.f32 %v626, %v664
    %v683 = vsub.f32 %v631, %v666
    %v684 = vsub.f32 %v634, %v668
    %v685 = vmul.f32 %v669, 1.442695
    %v686 = vpow.pop %v685
    %v687 = vmul.f32 %v670, 1.442695
    %v688 = vpow.pop %v687
    %v689 = vmul.f32 %v671, 1.442695
    %v690 = vpow.pop %v689
    %v691 = vmul.f32 %v672, 1.442695
    %v692 = vpow.pop %v691
    %v693 = vmul.f32 %v673, 1.442695
    %v694 = vpow.pop %v693
    %v695 = vmul.f32 %v674, 1.442695
    %v696 = vpow.pop %v695
    %v697 = vmul.f32 %v675, 1.442695
    %v698 = vpow.pop %v697
    %v699 = vmul.f32 %v676, 1.442695
    %v700 = vpow.pop %v699
    %v701 = vmul.f32 %v677, 1.442695
    %v702 = vpow.pop %v701
    %v703 = vmul.f32 %v678, 1.442695
    %v704 = vpow.pop %v703
    %v705 = vmul.f32 %v679, 1.442695
    %v706 = vpow.pop %v705
    %v707 = vmul.f32 %v680, 1.442695
    %v708 = vpow.pop %v707
    %v709 = vmul.f32 %v681, 1.442695
    %v710 = vpow.pop %v709
    %v711 = vmul.f32 %v682, 1.442695
    %v712 = vpow.pop %v711
    %v713 = vmul.f32 %v683, 1.442695
    %v714 = vpow.pop %v713
    %v715 = vmul.f32 %v684, 1.442695
    %v716 = vpow.pop %v715
    %v717 = vmul.f32 %v686, %v160
    %v718 = vmul.f32 %v688, %v161
    %v719 = vmul.f32 %v690, %v162
    %v720 = vmul.f32 %v692, %v163
    %v721 = vmul.f32 %v694, %v164
    %v722 = vmul.f32 %v696, %v165
    %v723 = vmul.f32 %v698, %v166
    %v724 = vmul.f32 %v700, %v167
    %v725 = vmul.f32 %v702, %v168
    %v726 = vmul.f32 %v704, %v169
    %v727 = vmul.f32 %v706, %v170
    %v728 = vmul.f32 %v708, %v171
    %v729 = vmul.f32 %v710, %v172
    %v730 = vmul.f32 %v712, %v173
    %v731 = vmul.f32 %v714, %v174
    %v732 = vmul.f32 %v716, %v175
    %v733 = vmul.f32 %v369, %v717
    %v734 = vmul.f32 %v373, %v718
    %v735 = vmul.f32 %v379, %v719
    %v736 = vmul.f32 %v383, %v720
    %v737 = vmul.f32 %v389, %v721
    %v738 = vmul.f32 %v393, %v722
    %v739 = vmul.f32 %v399, %v723
    %v740 = vmul.f32 %v403, %v724
    %v741 = vmul.f32 %v409, %v725
    %v742 = vmul.f32 %v413, %v726
    %v743 = vmul.f32 %v419, %v727
    %v744 = vmul.f32 %v423, %v728
    %v745 = vmul.f32 %v429, %v729
    %v746 = vmul.f32 %v433, %v730
    %v747 = vmul.f32 %v439, %v731
    %v748 = vmul.f32 %v443, %v732
    %749 = vadd.xlane.f32.xlu0 %v733
    %v750 = vpop.xlane.xlu0 %749
    %751 = vadd.xlane.f32.xlu0 %v734
    %v752 = vpop.xlane.xlu0 %751
    %753 = vadd.xlane.f32.xlu0 %v735
    %v754 = vpop.xlane.xlu0 %753
    %755 = vadd.xlane.f32.xlu0 %v736
    %v756 = vpop.xlane.xlu0 %755
    %757 = vadd.xlane.f32.xlu0 %v737
    %v758 = vpop.xlane.xlu0 %757
    %759 = vadd.xlane.f32.xlu0 %v738
    %v760 = vpop.xlane.xlu0 %759
    %761 = vadd.xlane.f32.xlu0 %v739
    %v762 = vpop.xlane.xlu0 %761
    %763 = vadd.xlane.f32.xlu0 %v740
    %v764 = vpop.xlane.xlu0 %763
    %765 = vadd.xlane.f32.xlu0 %v741
    %v766 = vpop.xlane.xlu0 %765
    %767 = vadd.xlane.f32.xlu0 %v742
    %v768 = vpop.xlane.xlu0 %767
    %769 = vadd.xlane.f32.xlu0 %v743
    %v770 = vpop.xlane.xlu0 %769
    %771 = vadd.xlane.f32.xlu0 %v744
    %v772 = vpop.xlane.xlu0 %771
    %773 = vadd.xlane.f32.xlu0 %v745
    %v774 = vpop.xlane.xlu0 %773
    %775 = vadd.xlane.f32.xlu0 %v746
    %v776 = vpop.xlane.xlu0 %775
    %777 = vadd.xlane.f32.xlu0 %v747
    %v778 = vpop.xlane.xlu0 %777
    %779 = vadd.xlane.f32.xlu0 %v748
    %v780 = vpop.xlane.xlu0 %779
    %v781 = vmul.f32 %v369, %v369
    %v782 = vmul.f32 %v373, %v373
    %v783 = vmul.f32 %v379, %v379
    %v784 = vmul.f32 %v383, %v383
    %v785 = vmul.f32 %v389, %v389
    %v786 = vmul.f32 %v393, %v393
    %v787 = vmul.f32 %v399, %v399
    %v788 = vmul.f32 %v403, %v403
    %v789 = vmul.f32 %v409, %v409
    %v790 = vmul.f32 %v413, %v413
    %v791 = vmul.f32 %v419, %v419
    %v792 = vmul.f32 %v423, %v423
    %v793 = vmul.f32 %v429, %v429
    %v794 = vmul.f32 %v433, %v433
    %v795 = vmul.f32 %v439, %v439
    %v796 = vmul.f32 %v443, %v443
    %797 = vadd.xlane.f32.xlu0 %v781
    %v798 = vpop.xlane.xlu0 %797
    %799 = vadd.xlane.f32.xlu0 %v782
    %v800 = vpop.xlane.xlu0 %799
    %801 = vadd.xlane.f32.xlu0 %v783
    %v802 = vpop.xlane.xlu0 %801
    %803 = vadd.xlane.f32.xlu0 %v784
    %v804 = vpop.xlane.xlu0 %803
    %805 = vadd.xlane.f32.xlu0 %v785
    %v806 = vpop.xlane.xlu0 %805
    %807 = vadd.xlane.f32.xlu0 %v786
    %v808 = vpop.xlane.xlu0 %807
    %809 = vadd.xlane.f32.xlu0 %v787
    %v810 = vpop.xlane.xlu0 %809
    %811 = vadd.xlane.f32.xlu0 %v788
    %v812 = vpop.xlane.xlu0 %811
    %813 = vadd.xlane.f32.xlu0 %v789
    %v814 = vpop.xlane.xlu0 %813
    %815 = vadd.xlane.f32.xlu0 %v790
    %v816 = vpop.xlane.xlu0 %815
    %817 = vadd.xlane.f32.xlu0 %v791
    %v818 = vpop.xlane.xlu0 %817
    %819 = vadd.xlane.f32.xlu0 %v792
    %v820 = vpop.xlane.xlu0 %819
    %821 = vadd.xlane.f32.xlu0 %v793
    %v822 = vpop.xlane.xlu0 %821
    %823 = vadd.xlane.f32.xlu0 %v794
    %v824 = vpop.xlane.xlu0 %823
    %825 = vadd.xlane.f32.xlu0 %v795
    %v826 = vpop.xlane.xlu0 %825
    %827 = vadd.xlane.f32.xlu0 %v796
    %v828 = vpop.xlane.xlu0 %827
    %v829 = vmul.f32 %v717, %v717
    %v830 = vmul.f32 %v718, %v718
    %v831 = vmul.f32 %v719, %v719
    %v832 = vmul.f32 %v720, %v720
    %v833 = vmul.f32 %v721, %v721
    %v834 = vmul.f32 %v722, %v722
    %v835 = vmul.f32 %v723, %v723
    %v836 = vmul.f32 %v724, %v724
    %v837 = vmul.f32 %v725, %v725
    %v838 = vmul.f32 %v726, %v726
    %v839 = vmul.f32 %v727, %v727
    %v840 = vmul.f32 %v728, %v728
    %v841 = vmul.f32 %v729, %v729
    %v842 = vmul.f32 %v730, %v730
    %v843 = vmul.f32 %v731, %v731
    %v844 = vmul.f32 %v732, %v732
    %845 = vadd.xlane.f32.xlu0 %v829
    %v846 = vpop.xlane.xlu0 %845
    %847 = vadd.xlane.f32.xlu0 %v830
    %v848 = vpop.xlane.xlu0 %847
    %849 = vadd.xlane.f32.xlu0 %v831
    %v850 = vpop.xlane.xlu0 %849
    %851 = vadd.xlane.f32.xlu0 %v832
    %v852 = vpop.xlane.xlu0 %851
    %853 = vadd.xlane.f32.xlu0 %v833
    %v854 = vpop.xlane.xlu0 %853
    %855 = vadd.xlane.f32.xlu0 %v834
    %v856 = vpop.xlane.xlu0 %855
    %857 = vadd.xlane.f32.xlu0 %v835
    %v858 = vpop.xlane.xlu0 %857
    %859 = vadd.xlane.f32.xlu0 %v836
    %v860 = vpop.xlane.xlu0 %859
    %861 = vadd.xlane.f32.xlu0 %v837
    %v862 = vpop.xlane.xlu0 %861
    %863 = vadd.xlane.f32.xlu0 %v838
    %v864 = vpop.xlane.xlu0 %863
    %865 = vadd.xlane.f32.xlu0 %v839
    %v866 = vpop.xlane.xlu0 %865
    %867 = vadd.xlane.f32.xlu0 %v840
    %v868 = vpop.xlane.xlu0 %867
    %869 = vadd.xlane.f32.xlu0 %v841
    %v870 = vpop.xlane.xlu0 %869
    %871 = vadd.xlane.f32.xlu0 %v842
    %v872 = vpop.xlane.xlu0 %871
    %873 = vadd.xlane.f32.xlu0 %v843
    %v874 = vpop.xlane.xlu0 %873
    %875 = vadd.xlane.f32.xlu0 %v844
    %v876 = vpop.xlane.xlu0 %875
    %v877 = vmul.f32 %v128, %v160
    %v878 = vmul.f32 %v129, %v161
    %v879 = vmul.f32 %v130, %v162
    %v880 = vmul.f32 %v131, %v163
    %v881 = vmul.f32 %v132, %v164
    %v882 = vmul.f32 %v133, %v165
    %v883 = vmul.f32 %v134, %v166
    %v884 = vmul.f32 %v135, %v167
    %v885 = vmul.f32 %v136, %v168
    %v886 = vmul.f32 %v137, %v169
    %v887 = vmul.f32 %v138, %v170
    %v888 = vmul.f32 %v139, %v171
    %v889 = vmul.f32 %v140, %v172
    %v890 = vmul.f32 %v141, %v173
    %v891 = vmul.f32 %v142, %v174
    %v892 = vmul.f32 %v143, %v175
    %893 = vadd.xlane.f32.xlu0 %v877
    %v894 = vpop.xlane.xlu0 %893
    %895 = vadd.xlane.f32.xlu0 %v878
    %v896 = vpop.xlane.xlu0 %895
    %897 = vadd.xlane.f32.xlu0 %v879
    %v898 = vpop.xlane.xlu0 %897
    %899 = vadd.xlane.f32.xlu0 %v880
    %v900 = vpop.xlane.xlu0 %899
    %901 = vadd.xlane.f32.xlu0 %v881
    %v902 = vpop.xlane.xlu0 %901
    %903 = vadd.xlane.f32.xlu0 %v882
    %v904 = vpop.xlane.xlu0 %903
    %905 = vadd.xlane.f32.xlu0 %v883
    %v906 = vpop.xlane.xlu0 %905
    %907 = vadd.xlane.f32.xlu0 %v884
    %v908 = vpop.xlane.xlu0 %907
    %909 = vadd.xlane.f32.xlu0 %v885
    %v910 = vpop.xlane.xlu0 %909
    %911 = vadd.xlane.f32.xlu0 %v886
    %v912 = vpop.xlane.xlu0 %911
    %913 = vadd.xlane.f32.xlu0 %v887
    %v914 = vpop.xlane.xlu0 %913
    %915 = vadd.xlane.f32.xlu0 %v888
    %v916 = vpop.xlane.xlu0 %915
    %917 = vadd.xlane.f32.xlu0 %v889
    %v918 = vpop.xlane.xlu0 %917
    %919 = vadd.xlane.f32.xlu0 %v890
    %v920 = vpop.xlane.xlu0 %919
    %921 = vadd.xlane.f32.xlu0 %v891
    %v922 = vpop.xlane.xlu0 %921
    %923 = vadd.xlane.f32.xlu0 %v892
    %v924 = vpop.xlane.xlu0 %923
    %v925 = vmul.f32 %v128, %v128
    %v926 = vmul.f32 %v129, %v129
    %v927 = vmul.f32 %v130, %v130
    %v928 = vmul.f32 %v131, %v131
    %v929 = vmul.f32 %v132, %v132
    %v930 = vmul.f32 %v133, %v133
    %v931 = vmul.f32 %v134, %v134
    %v932 = vmul.f32 %v135, %v135
    %v933 = vmul.f32 %v136, %v136
    %v934 = vmul.f32 %v137, %v137
    %v935 = vmul.f32 %v138, %v138
    %v936 = vmul.f32 %v139, %v139
    %v937 = vmul.f32 %v140, %v140
    %v938 = vmul.f32 %v141, %v141
    %v939 = vmul.f32 %v142, %v142
    %v940 = vmul.f32 %v143, %v143
    %941 = vadd.xlane.f32.xlu0 %v925
    %v942 = vpop.xlane.xlu0 %941
    %943 = vadd.xlane.f32.xlu0 %v926
    %v944 = vpop.xlane.xlu0 %943
    %945 = vadd.xlane.f32.xlu0 %v927
    %v946 = vpop.xlane.xlu0 %945
    %947 = vadd.xlane.f32.xlu0 %v928
    %v948 = vpop.xlane.xlu0 %947
    %949 = vadd.xlane.f32.xlu0 %v929
    %v950 = vpop.xlane.xlu0 %949
    %951 = vadd.xlane.f32.xlu0 %v930
    %v952 = vpop.xlane.xlu0 %951
    %953 = vadd.xlane.f32.xlu0 %v931
    %v954 = vpop.xlane.xlu0 %953
    %955 = vadd.xlane.f32.xlu0 %v932
    %v956 = vpop.xlane.xlu0 %955
    %957 = vadd.xlane.f32.xlu0 %v933
    %v958 = vpop.xlane.xlu0 %957
    %959 = vadd.xlane.f32.xlu0 %v934
    %v960 = vpop.xlane.xlu0 %959
    %961 = vadd.xlane.f32.xlu0 %v935
    %v962 = vpop.xlane.xlu0 %961
    %963 = vadd.xlane.f32.xlu0 %v936
    %v964 = vpop.xlane.xlu0 %963
    %965 = vadd.xlane.f32.xlu0 %v937
    %v966 = vpop.xlane.xlu0 %965
    %967 = vadd.xlane.f32.xlu0 %v938
    %v968 = vpop.xlane.xlu0 %967
    %969 = vadd.xlane.f32.xlu0 %v939
    %v970 = vpop.xlane.xlu0 %969
    %971 = vadd.xlane.f32.xlu0 %v940
    %v972 = vpop.xlane.xlu0 %971
    %v973 = vmul.f32 %v160, %v160
    %v974 = vmul.f32 %v161, %v161
    %v975 = vmul.f32 %v162, %v162
    %v976 = vmul.f32 %v163, %v163
    %v977 = vmul.f32 %v164, %v164
    %v978 = vmul.f32 %v165, %v165
    %v979 = vmul.f32 %v166, %v166
    %v980 = vmul.f32 %v167, %v167
    %v981 = vmul.f32 %v168, %v168
    %v982 = vmul.f32 %v169, %v169
    %v983 = vmul.f32 %v170, %v170
    %v984 = vmul.f32 %v171, %v171
    %v985 = vmul.f32 %v172, %v172
    %v986 = vmul.f32 %v173, %v173
    %v987 = vmul.f32 %v174, %v174
    %v988 = vmul.f32 %v175, %v175
    %989 = vadd.xlane.f32.xlu0 %v973
    %v990 = vpop.xlane.xlu0 %989
    %991 = vadd.xlane.f32.xlu0 %v974
    %v992 = vpop.xlane.xlu0 %991
    %993 = vadd.xlane.f32.xlu0 %v975
    %v994 = vpop.xlane.xlu0 %993
    %995 = vadd.xlane.f32.xlu0 %v976
    %v996 = vpop.xlane.xlu0 %995
    %997 = vadd.xlane.f32.xlu0 %v977
    %v998 = vpop.xlane.xlu0 %997
    %999 = vadd.xlane.f32.xlu0 %v978
    %v1000 = vpop.xlane.xlu0 %999
    %1001 = vadd.xlane.f32.xlu0 %v979
    %v1002 = vpop.xlane.xlu0 %1001
    %1003 = vadd.xlane.f32.xlu0 %v980
    %v1004 = vpop.xlane.xlu0 %1003
    %1005 = vadd.xlane.f32.xlu0 %v981
    %v1006 = vpop.xlane.xlu0 %1005
    %1007 = vadd.xlane.f32.xlu0 %v982
    %v1008 = vpop.xlane.xlu0 %1007
    %1009 = vadd.xlane.f32.xlu0 %v983
    %v1010 = vpop.xlane.xlu0 %1009
    %1011 = vadd.xlane.f32.xlu0 %v984
    %v1012 = vpop.xlane.xlu0 %1011
    %1013 = vadd.xlane.f32.xlu0 %v985
    %v1014 = vpop.xlane.xlu0 %1013
    %1015 = vadd.xlane.f32.xlu0 %v986
    %v1016 = vpop.xlane.xlu0 %1015
    %1017 = vadd.xlane.f32.xlu0 %v987
    %v1018 = vpop.xlane.xlu0 %1017
    %1019 = vadd.xlane.f32.xlu0 %v988
    %v1020 = vpop.xlane.xlu0 %1019
    %v1021 = vrsqrt.pop %v798
    %v1022 = vrsqrt.pop %v800
    %v1023 = vrsqrt.pop %v802
    %v1024 = vrsqrt.pop %v804
    %v1025 = vrsqrt.pop %v806
    %v1026 = vrsqrt.pop %v808
    %v1027 = vrsqrt.pop %v810
    %v1028 = vrsqrt.pop %v812
    %v1029 = vrsqrt.pop %v814
    %v1030 = vrsqrt.pop %v816
    %v1031 = vrsqrt.pop %v818
    %v1032 = vrsqrt.pop %v820
    %v1033 = vrsqrt.pop %v822
    %v1034 = vrsqrt.pop %v824
    %v1035 = vrsqrt.pop %v826
    %v1036 = vrsqrt.pop %v828
    %v1037 = vmul.f32 %v750, %v1021
    %v1038 = vmul.f32 %v752, %v1022
    %v1039 = vmul.f32 %v754, %v1023
    %v1040 = vmul.f32 %v756, %v1024
    %v1041 = vmul.f32 %v758, %v1025
    %v1042 = vmul.f32 %v760, %v1026
    %v1043 = vmul.f32 %v762, %v1027
    %v1044 = vmul.f32 %v764, %v1028
    %v1045 = vmul.f32 %v766, %v1029
    %v1046 = vmul.f32 %v768, %v1030
    %v1047 = vmul.f32 %v770, %v1031
    %v1048 = vmul.f32 %v772, %v1032
    %v1049 = vmul.f32 %v774, %v1033
    %v1050 = vmul.f32 %v776, %v1034
    %v1051 = vmul.f32 %v778, %v1035
    %v1052 = vmul.f32 %v780, %v1036
    %v1053 = vrsqrt.pop %v846
    %v1054 = vrsqrt.pop %v848
    %v1055 = vrsqrt.pop %v850
    %v1056 = vrsqrt.pop %v852
    %v1057 = vrsqrt.pop %v854
    %v1058 = vrsqrt.pop %v856
    %v1059 = vrsqrt.pop %v858
    %v1060 = vrsqrt.pop %v860
    %v1061 = vrsqrt.pop %v862
    %v1062 = vrsqrt.pop %v864
    %v1063 = vrsqrt.pop %v866
    %v1064 = vrsqrt.pop %v868
    %v1065 = vrsqrt.pop %v870
    %v1066 = vrsqrt.pop %v872
    %v1067 = vrsqrt.pop %v874
    %v1068 = vrsqrt.pop %v876
    %v1069 = vmul.f32 %v1037, %v1053
    %v1070 = vmul.f32 %v1038, %v1054
    %v1071 = vmul.f32 %v1039, %v1055
    %v1072 = vmul.f32 %v1040, %v1056
    %v1073 = vmul.f32 %v1041, %v1057
    %v1074 = vmul.f32 %v1042, %v1058
    %v1075 = vmul.f32 %v1043, %v1059
    %v1076 = vmul.f32 %v1044, %v1060
    %v1077 = vmul.f32 %v1045, %v1061
    %v1078 = vmul.f32 %v1046, %v1062
    %v1079 = vmul.f32 %v1047, %v1063
    %v1080 = vmul.f32 %v1048, %v1064
    %v1081 = vmul.f32 %v1049, %v1065
    %v1082 = vmul.f32 %v1050, %v1066
    %v1083 = vmul.f32 %v1051, %v1067
    %v1084 = vmul.f32 %v1052, %v1068
    %v1085 = vrsqrt.pop %v942
    %v1086 = vrsqrt.pop %v944
    %v1087 = vrsqrt.pop %v946
    %v1088 = vrsqrt.pop %v948
    %v1089 = vrsqrt.pop %v950
    %v1090 = vrsqrt.pop %v952
    %v1091 = vrsqrt.pop %v954
    %v1092 = vrsqrt.pop %v956
    %v1093 = vrsqrt.pop %v958
    %v1094 = vrsqrt.pop %v960
    %v1095 = vrsqrt.pop %v962
    %v1096 = vrsqrt.pop %v964
    %v1097 = vrsqrt.pop %v966
    %v1098 = vrsqrt.pop %v968
    %v1099 = vrsqrt.pop %v970
    %v1100 = vrsqrt.pop %v972
    %v1101 = vmul.f32 %v894, %v1085
    %v1102 = vmul.f32 %v896, %v1086
    %v1103 = vmul.f32 %v898, %v1087
    %v1104 = vmul.f32 %v900, %v1088
    %v1105 = vmul.f32 %v902, %v1089
    %v1106 = vmul.f32 %v904, %v1090
    %v1107 = vmul.f32 %v906, %v1091
    %v1108 = vmul.f32 %v908, %v1092
    %v1109 = vmul.f32 %v910, %v1093
    %v1110 = vmul.f32 %v912, %v1094
    %v1111 = vmul.f32 %v914, %v1095
    %v1112 = vmul.f32 %v916, %v1096
    %v1113 = vmul.f32 %v918, %v1097
    %v1114 = vmul.f32 %v920, %v1098
    %v1115 = vmul.f32 %v922, %v1099
    %v1116 = vmul.f32 %v924, %v1100
    %v1117 = vrsqrt.pop %v990
    %v1118 = vrsqrt.pop %v992
    %v1119 = vrsqrt.pop %v994
    %v1120 = vrsqrt.pop %v996
    %v1121 = vrsqrt.pop %v998
    %v1122 = vrsqrt.pop %v1000
    %v1123 = vrsqrt.pop %v1002
    %v1124 = vrsqrt.pop %v1004
    %v1125 = vrsqrt.pop %v1006
    %v1126 = vrsqrt.pop %v1008
    %v1127 = vrsqrt.pop %v1010
    %v1128 = vrsqrt.pop %v1012
    %v1129 = vrsqrt.pop %v1014
    %v1130 = vrsqrt.pop %v1016
    %v1131 = vrsqrt.pop %v1018
    %v1132 = vrsqrt.pop %v1020
    %v1133 = vmul.f32 %v1101, %v1117
    %v1134 = vmul.f32 %v1102, %v1118
    %v1135 = vmul.f32 %v1103, %v1119
    %v1136 = vmul.f32 %v1104, %v1120
    %v1137 = vmul.f32 %v1105, %v1121
    %v1138 = vmul.f32 %v1106, %v1122
    %v1139 = vmul.f32 %v1107, %v1123
    %v1140 = vmul.f32 %v1108, %v1124
    %v1141 = vmul.f32 %v1109, %v1125
    %v1142 = vmul.f32 %v1110, %v1126
    %v1143 = vmul.f32 %v1111, %v1127
    %v1144 = vmul.f32 %v1112, %v1128
    %v1145 = vmul.f32 %v1113, %v1129
    %v1146 = vmul.f32 %v1114, %v1130
    %v1147 = vmul.f32 %v1115, %v1131
    %v1148 = vmul.f32 %v1116, %v1132
    %v1149 = vadd.f32 %v1069, %v1133
    %v1150 = vadd.f32 %v1070, %v1134
    %v1151 = vadd.f32 %v1071, %v1135
    %v1152 = vadd.f32 %v1072, %v1136
    %v1153 = vadd.f32 %v1073, %v1137
    %v1154 = vadd.f32 %v1074, %v1138
    %v1155 = vadd.f32 %v1075, %v1139
    %v1156 = vadd.f32 %v1076, %v1140
    %v1157 = vadd.f32 %v1077, %v1141
    %v1158 = vadd.f32 %v1078, %v1142
    %v1159 = vadd.f32 %v1079, %v1143
    %v1160 = vadd.f32 %v1080, %v1144
    %v1161 = vadd.f32 %v1081, %v1145
    %v1162 = vadd.f32 %v1082, %v1146
    %v1163 = vadd.f32 %v1083, %v1147
    %v1164 = vadd.f32 %v1084, %v1148
    %v1181 = vlaneseq
    %v1182 = vand.u32 %v1181, 127
    %v1183 = vlaneseq
    %v1184 = vshrl.u32 %v1183, 7
    %v1185 = vsub.s32 %v1182, %v1184
    %v1186 = vrot.slane %v1149, %v1185
    %v1187 = vadd.s32 %v1182, 4294967288
    %v1188 = vlaneseq
    %v1189 = vshrl.u32 %v1188, 7
    %v1190 = vsub.s32 %v1187, %v1189
    %v1191 = vrot.slane %v1150, %v1190
    %vm1192 = vcmask 130112
    %v1193 = vsel %vm1192, %v1191, %v1186
    %v1194 = vadd.s32 %v1182, 4294967280
    %v1195 = vlaneseq
    %v1196 = vshrl.u32 %v1195, 7
    %v1197 = vsub.s32 %v1194, %v1196
    %v1198 = vrot.slane %v1151, %v1197
    %vm1199 = vcmask 195712
    %v1200 = vsel %vm1199, %v1198, %v1193
    %v1201 = vadd.s32 %v1182, 4294967272
    %v1202 = vlaneseq
    %v1203 = vshrl.u32 %v1202, 7
    %v1204 = vsub.s32 %v1201, %v1203
    %v1205 = vrot.slane %v1152, %v1204
    %vm1206 = vcmask 261312
    %v1207 = vsel %vm1206, %v1205, %v1200
    %v1208 = vadd.s32 %v1182, 4294967264
    %v1209 = vlaneseq
    %v1210 = vshrl.u32 %v1209, 7
    %v1211 = vsub.s32 %v1208, %v1210
    %v1212 = vrot.slane %v1153, %v1211
    %vm1213 = vcmask 326912
    %v1214 = vsel %vm1213, %v1212, %v1207
    %v1215 = vadd.s32 %v1182, 4294967256
    %v1216 = vlaneseq
    %v1217 = vshrl.u32 %v1216, 7
    %v1218 = vsub.s32 %v1215, %v1217
    %v1219 = vrot.slane %v1154, %v1218
    %vm1220 = vcmask 392512
    %v1221 = vsel %vm1220, %v1219, %v1214
    %v1222 = vadd.s32 %v1182, 4294967248
    %v1223 = vlaneseq
    %v1224 = vshrl.u32 %v1223, 7
    %v1225 = vsub.s32 %v1222, %v1224
    %v1226 = vrot.slane %v1155, %v1225
    %vm1227 = vcmask 458112
    %v1228 = vsel %vm1227, %v1226, %v1221
    %v1229 = vadd.s32 %v1182, 4294967240
    %v1230 = vlaneseq
    %v1231 = vshrl.u32 %v1230, 7
    %v1232 = vsub.s32 %v1229, %v1231
    %v1233 = vrot.slane %v1156, %v1232
    %vm1234 = vcmask 523712
    %v1235 = vsel %vm1234, %v1233, %v1228
    %v1236 = vadd.s32 %v1182, 4294967232
    %v1237 = vlaneseq
    %v1238 = vshrl.u32 %v1237, 7
    %v1239 = vsub.s32 %v1236, %v1238
    %v1240 = vrot.slane %v1157, %v1239
    %vm1241 = vcmask 589312
    %v1242 = vsel %vm1241, %v1240, %v1235
    %v1243 = vadd.s32 %v1182, 4294967224
    %v1244 = vlaneseq
    %v1245 = vshrl.u32 %v1244, 7
    %v1246 = vsub.s32 %v1243, %v1245
    %v1247 = vrot.slane %v1158, %v1246
    %vm1248 = vcmask 654912
    %v1249 = vsel %vm1248, %v1247, %v1242
    %v1250 = vadd.s32 %v1182, 4294967216
    %v1251 = vlaneseq
    %v1252 = vshrl.u32 %v1251, 7
    %v1253 = vsub.s32 %v1250, %v1252
    %v1254 = vrot.slane %v1159, %v1253
    %vm1255 = vcmask 720512
    %v1256 = vsel %vm1255, %v1254, %v1249
    %v1257 = vadd.s32 %v1182, 4294967208
    %v1258 = vlaneseq
    %v1259 = vshrl.u32 %v1258, 7
    %v1260 = vsub.s32 %v1257, %v1259
    %v1261 = vrot.slane %v1160, %v1260
    %vm1262 = vcmask 786112
    %v1263 = vsel %vm1262, %v1261, %v1256
    %v1264 = vadd.s32 %v1182, 4294967200
    %v1265 = vlaneseq
    %v1266 = vshrl.u32 %v1265, 7
    %v1267 = vsub.s32 %v1264, %v1266
    %v1268 = vrot.slane %v1161, %v1267
    %vm1269 = vcmask 851712
    %v1270 = vsel %vm1269, %v1268, %v1263
    %v1271 = vadd.s32 %v1182, 4294967192
    %v1272 = vlaneseq
    %v1273 = vshrl.u32 %v1272, 7
    %v1274 = vsub.s32 %v1271, %v1273
    %v1275 = vrot.slane %v1162, %v1274
    %vm1276 = vcmask 917312
    %v1277 = vsel %vm1276, %v1275, %v1270
    %v1278 = vadd.s32 %v1182, 4294967184
    %v1279 = vlaneseq
    %v1280 = vshrl.u32 %v1279, 7
    %v1281 = vsub.s32 %v1278, %v1280
    %v1282 = vrot.slane %v1163, %v1281
    %vm1283 = vcmask 982912
    %v1284 = vsel %vm1283, %v1282, %v1277
    %v1285 = vadd.s32 %v1182, 4294967176
    %v1286 = vlaneseq
    %v1287 = vshrl.u32 %v1286, 7
    %v1288 = vsub.s32 %v1285, %v1287
    %v1289 = vrot.slane %v1164, %v1288
    %vm1290 = vcmask 1048512
    %v1291 = vsel %vm1290, %v1289, %v1284
    %1293 = vst [vmem:[#allocation11] sm:$0x1] %v1291
    // Predicated region
    $region50: #{tpu_custom_call.1} parent=1 // pred_check
      _
    $region51: #{tpu_custom_call.1} parent=1 // pred_check_branch
      %1295 = sbr.rel (0) target = $region53
    $region52: #{tpu_custom_call.1} parent=1 // pred_region
      %s1297 = ssub.s32 16, 16
      %1298 = vsyncadd [#allocation4], %s1297
      %s1300 = sshll.u32 [#allocation11], 4
      %s1301 = int_to_ptr.vmem [resolvable:$true] %s1300
      %1303 = dma.vmem_to_hbm [thread:$0]  %s1301, 16, %s7, [#allocation4]
    $region53: #{tpu_custom_call.1} parent=1 // pred_fallthru
      _
    // Predicated region
    $region54: #{tpu_custom_call.1} parent=1 // pred_check
      _
    $region55: #{tpu_custom_call.1} parent=1 // pred_check_branch
      %1305 = sbr.rel (0) target = $region57
    $region56: #{tpu_custom_call.1} parent=1 // pred_region
      %1306 = dma.done [#allocation4], 16
    $region57: #{tpu_custom_call.1} parent=1 // pred_fallthru
      _
    %1307 = vsyncpa [#allocation3], 1
    %1308 = vsyncpa [#allocation6], 1
    %1309 = vsyncpa [#allocation9], 1
    %1310 = vsyncpa [#allocation4], 1

</llo_original>
